<compile_context>
chip_gen: v7x
topology: tpu7x:2x2x1
jax: 0.10.0
libtpu: 0.0.40
codegen_flags: <defaults>
</compile_context>

<pallas_src>
from functools import partial

import jax
import jax.numpy as jnp
from jax.experimental import pallas as pl
from jax.experimental.pallas import tpu as pltpu


def _round_up(x, m):
    return ((x + m - 1) // m) * m


# ---------------------------------------------------------------------------
# Kernels
# ---------------------------------------------------------------------------
def _mm_kernel_acc(*refs, has_bias):
    """General kernel: grid = (i, j, k); K reduced into an f32 VMEM scratch."""
    if has_bias:
        x_ref, w_ref, b_ref, o_ref, acc_ref = refs
    else:
        x_ref, w_ref, o_ref, acc_ref = refs
        b_ref = None

    k = pl.program_id(2)
    prod = jnp.dot(x_ref[...], w_ref[...], preferred_element_type=jnp.float32)

    @pl.when(k == 0)
    def _():
        acc_ref[...] = prod          # first K step: write, no zero-init pass

    @pl.when(k != 0)
    def _():
        acc_ref[...] += prod

    @pl.when(k == pl.num_programs(2) - 1)
    def _():
        out = acc_ref[...]
        if b_ref is not None:
            out = out + b_ref[...].astype(jnp.float32)
        o_ref[...] = out.astype(o_ref.dtype)


def _mm_kernel_single_k(*refs, has_bias):
    """Fast path when the whole contraction fits in a single K step."""
    if has_bias:
        x_ref, w_ref, b_ref, o_ref = refs
    else:
        x_ref, w_ref, o_ref = refs
        b_ref = None

    out = jnp.dot(x_ref[...], w_ref[...], preferred_element_type=jnp.float32)
    if b_ref is not None:
        out = out + b_ref[...].astype(jnp.float32)
    o_ref[...] = out.astype(o_ref.dtype)


# ---------------------------------------------------------------------------
# Tile / VMEM budgeting helpers
# ---------------------------------------------------------------------------
def _vmem_budget_bytes():
    cap = 64 * 1024 * 1024  # conservative fallback (v7x per-TensorCore VMEM)
    try:
        info = pltpu.get_tpu_info()
        cap = int(getattr(info, "vmem_capacity_bytes", cap)) or cap
    except Exception:
        pass
    return (cap * 3) // 4


def _fit_tiles_to_budget(tm, tn, tk, sub, in_itemsize, out_itemsize, budget):
    """Shrink tiles (tk first, then the larger of tn/tm) until the pipelined
    working set fits comfortably inside the VMEM budget."""
    def est(tm_, tn_, tk_):
        return (2 * (tm_ * tk_ + tk_ * tn_) * in_itemsize  # double-buffered inputs
                + 2 * tm_ * tn_ * out_itemsize             # double-buffered output
                + tm_ * tn_ * 4                            # f32 accumulator
                + 2 * tn_ * out_itemsize)                  # bias tile

    limit = (budget * 4) // 5
    while est(tm, tn, tk) > limit:
        if tk > 256:
            tk = max(128, _round_up(tk // 2, 128))
        elif tn >= tm and tn > 128:
            tn = max(128, _round_up(tn // 2, 128))
        elif tm > sub:
            tm = max(sub, _round_up(tm // 2, sub))
        else:
            break
    return tm, tn, tk, est(tm, tn, tk)


# ---------------------------------------------------------------------------
# Forward wrapper
# ---------------------------------------------------------------------------
def mm_forward(x, weight, bias=None, *, tm=512, tn=512, tk=2048):
    """y = x @ weight (+ bias).  x: (..., nx), weight: (nx, nf), bias: (nf,) or None."""
    nx, nf = weight.shape
    assert x.shape[-1] == nx, "last dim of x must equal weight.shape[0]"
    size_out = x.shape[:-1] + (nf,)
    x2d = x.reshape(-1, nx)
    M = x2d.shape[0]

    out_dtype = jnp.result_type(x.dtype, weight.dtype)
    x_itemsize = jnp.dtype(x.dtype).itemsize
    w_itemsize = jnp.dtype(weight.dtype).itemsize
    out_itemsize = jnp.dtype(out_dtype).itemsize
    in_itemsize = max(x_itemsize, w_itemsize)
    # dtype-aware sublane multiple: f32 -> 8, bf16 -> 16, int8/fp8 -> 32
    sub = max(8, 32 // min(x_itemsize, w_itemsize, out_itemsize))

    budget = _vmem_budget_bytes()

    # ---- clamp tiles to the problem, keep (sublane, lane) alignment ----
    tm = _round_up(min(tm, _round_up(M, sub)), sub)
    tn = _round_up(min(tn, _round_up(nf, 128)), 128)
    tk = _round_up(min(tk, _round_up(nx, 128)), 128)

    # ---- derive final tiles from the VMEM budget (not the other way round) ----
    tm, tn, tk, est = _fit_tiles_to_budget(tm, tn, tk, sub,
                                           in_itemsize, out_itemsize, budget)

    # ---- give both v7x TensorCores work when the output grid degenerates ----
    if pl.cdiv(M, tm) * pl.cdiv(nf, tn) == 1:
        if tn > 128:
            tn = _round_up(tn // 2, 128)
        elif tm > sub:
            tm = _round_up(tm // 2, sub)

    # ---- pad K only (zeros along K do not change the matmul); ragged M / N
    #      are handled by Pallas partial edge blocks, no pad / slice needed ----
    Kp = _round_up(nx, tk)
    if Kp != nx:
        x2d = jnp.pad(x2d, ((0, 0), (0, Kp - nx)))
        w = jnp.pad(weight, ((0, Kp - nx), (0, 0)))
    else:
        w = weight

    grid_i = pl.cdiv(M, tm)
    grid_j = pl.cdiv(nf, tn)
    grid_k = Kp // tk
    grid = (grid_i, grid_j, grid_k)
    single_k = grid_k == 1
    has_bias = bias is not None

    in_specs = [
        pl.BlockSpec((tm, tk), lambda i, j, k: (i, k)),   # x tile
        pl.BlockSpec((tk, tn), lambda i, j, k: (k, j)),   # weight tile
    ]
    args = [x2d, w]
    if has_bias:
        in_specs.append(pl.BlockSpec((1, tn), lambda i, j, k: (0, j)))
        args.append(bias.reshape(1, nf))

    kernel = partial(_mm_kernel_single_k if single_k else _mm_kernel_acc,
                     has_bias=has_bias)
    scratch_shapes = [] if single_k else [pltpu.VMEM((tm, tn), jnp.float32)]

    # Advisory cost estimate, including tile re-read factors on padded sizes.
    bytes_accessed = (grid_j * M * Kp * x_itemsize       # x read once per j
                      + grid_i * Kp * nf * w_itemsize    # w read once per i
                      + M * nf * out_itemsize)
    if has_bias:
        bytes_accessed += grid_i * nf * jnp.dtype(bias.dtype).itemsize
    cost = pl.CostEstimate(flops=2 * M * Kp * nf, transcendentals=0,
                           bytes_accessed=int(bytes_accessed))

    vmem_limit = int(min(budget, max(2 * est, 32 * 1024 * 1024)))

    out = pl.pallas_call(
        kernel,
        out_shape=jax.ShapeDtypeStruct((M, nf), out_dtype),
        grid_spec=pltpu.PrefetchScalarGridSpec(
            num_scalar_prefetch=0,
            grid=grid,
            in_specs=in_specs,
            out_specs=pl.BlockSpec((tm, tn), lambda i, j, k: (i, j)),
            scratch_shapes=scratch_shapes,
        ),
        compiler_params=pltpu.CompilerParams(
            dimension_semantics=("parallel", "parallel", "arbitrary"),
            vmem_limit_bytes=vmem_limit,
        ),
        cost_estimate=cost,
    )(*args)

    return out.reshape(size_out)


if __name__ == "__main__":
    key = jax.random.PRNGKey(0)
    kx, kw, kx2, kw2, kb2, kx3, kw3 = jax.random.split(key, 7)

    # --- aligned case: nx=128 -> nf=256, x (2, 8, 128), f32, with bias ---
    nx, nf = 128, 256
    weight = (0.02 * jax.random.normal(kw, (nx, nf))).astype(jnp.float32)
    bias = jnp.zeros((nf,), jnp.float32)
    x = jax.random.normal(kx, (2, 8, nx), dtype=jnp.float32)

    y = jax.block_until_ready(mm_forward(x, weight, bias))
    y_ref = (x.reshape(-1, nx) @ weight + bias).reshape(2, 8, nf)
    assert y.shape == (2, 8, nf)
    assert jnp.allclose(y, y_ref, atol=1e-5, rtol=1e-5)

    # --- ragged case (K zero-pad + partial M/N edge blocks): nx=96 -> nf=200 ---
    nx2, nf2 = 96, 200
    weight2 = (0.02 * jax.random.normal(kw2, (nx2, nf2))).astype(jnp.float32)
    bias2 = (0.1 * jax.random.normal(kb2, (nf2,))).astype(jnp.float32)
    x2 = jax.random.normal(kx2, (2, 7, nx2), dtype=jnp.float32)

    y2 = jax.block_until_ready(mm_forward(x2, weight2, bias2))
    y2_ref = (x2.reshape(-1, nx2) @ weight2 + bias2).reshape(2, 7, nf2)
    assert y2.shape == (2, 7, nf2)
    assert jnp.allclose(y2, y2_ref, atol=1e-5, rtol=1e-5)

    # --- no-bias variant (torch.mm path) ---
    y3 = jax.block_until_ready(mm_forward(x2, weight2, None))
    y3_ref = (x2.reshape(-1, nx2) @ weight2).reshape(2, 7, nf2)
    assert jnp.allclose(y3, y3_ref, atol=1e-5, rtol=1e-5)

    # --- multi-K-step reduction path (accumulator kernel, explicit small tk) ---
    nx3, nf3 = 256, 128
    weight3 = (0.02 * jax.random.normal(kw3, (nx3, nf3))).astype(jnp.float32)
    bias3 = jnp.zeros((nf3,), jnp.float32)
    x3 = jax.random.normal(kx3, (2, 8, nx3), dtype=jnp.float32)
    y4 = jax.block_until_ready(mm_forward(x3, weight3, bias3, tk=128))
    y4_ref = (x3.reshape(-1, nx3) @ weight3 + bias3).reshape(2, 8, nf3)
    assert jnp.allclose(y4, y4_ref, atol=1e-5, rtol=1e-5)

    # --- bf16 inputs (f32 accumulation inside the kernel, bf16 output) ---
    xb = x.astype(jnp.bfloat16)
    wb = weight.astype(jnp.bfloat16)
    bb = bias.astype(jnp.bfloat16)
    yb = jax.block_until_ready(mm_forward(xb, wb, bb))
    yb_ref = (xb.astype(jnp.float32).reshape(-1, nx) @ wb.astype(jnp.float32)
              + bb.astype(jnp.float32)).reshape(2, 8, nf)
    assert yb.dtype == jnp.bfloat16
    assert jnp.allclose(yb.astype(jnp.float32), yb_ref, atol=2e-2, rtol=2e-2)

    print("KERNEL_OK")
</pallas_src>

<mosaic_0001>
module attributes {stable_mosaic.version = 11 : i64} {
  func.func @_mm_kernel_single_k(%arg0: i32, %arg1: i32, %arg2: i32, %arg3: memref<16x128xf32, #tpu.memory_space<vmem>>, %arg4: memref<128x128xf32, #tpu.memory_space<vmem>>, %arg5: memref<1x128xf32, #tpu.memory_space<vmem>>, %arg6: memref<16x128xf32, #tpu.memory_space<vmem>>) attributes {dimension_semantics = [#tpu.dimension_semantics<parallel>, #tpu.dimension_semantics<parallel>, #tpu.dimension_semantics<arbitrary>], iteration_bounds = array<i64: 1, 2, 1>, scalar_prefetch = 0 : i64, scratch_operands = 0 : i64, tpu.core_type = #tpu.core_type<tc>, window_params = [{transform_indices = @transform_0, window_bounds = array<i64: 16, 128>}, {transform_indices = @transform_1, window_bounds = array<i64: 128, 128>}, {transform_indices = @transform_2, window_bounds = array<i64: 1, 128>}, {transform_indices = @transform_3, window_bounds = array<i64: 16, 128>}]} {
    %c0 = arith.constant 0 : index
    %c0_0 = arith.constant 0 : index
    %0 = vector.load %arg3[%c0, %c0_0] : memref<16x128xf32, #tpu.memory_space<vmem>>, vector<16x128xf32>
    %c0_1 = arith.constant 0 : index
    %c0_2 = arith.constant 0 : index
    %1 = vector.load %arg4[%c0_1, %c0_2] : memref<128x128xf32, #tpu.memory_space<vmem>>, vector<128x128xf32>
    %cst = arith.constant dense<0.000000e+00> : vector<16x128xf32>
    %2 = tpu.matmul %0, %1, %cst {dimension_numbers = #tpu.dot_dimension_numbers<[1], [0], [0], [1], [0, 0, 1, 1], [], []>} : vector<16x128xf32>, vector<128x128xf32>, vector<16x128xf32> -> vector<16x128xf32>
    %c0_3 = arith.constant 0 : index
    %c0_4 = arith.constant 0 : index
    %3 = vector.load %arg5[%c0_3, %c0_4] : memref<1x128xf32, #tpu.memory_space<vmem>>, vector<1x128xf32>
    %4 = vector.broadcast %3 : vector<1x128xf32> to vector<16x128xf32>
    %5 = arith.addf %2, %4 : vector<16x128xf32>
    %c0_5 = arith.constant 0 : index
    %c0_6 = arith.constant 0 : index
    %6 = vector.load %arg6[%c0_5, %c0_6] : memref<16x128xf32, #tpu.memory_space<vmem>>, vector<16x128xf32>
    tpu.vector_store %arg6[%c0_5, %c0_6], %5 {strides = array<i32>} : memref<16x128xf32, #tpu.memory_space<vmem>>, vector<16x128xf32>,
    return
  }
  func.func @transform_0(%arg0: i32, %arg1: i32, %arg2: i32) -> (i32, i32) {
    %c0_i32 = arith.constant 0 : i32
    return %arg0, %arg2 : i32, i32
  }
  func.func @transform_1(%arg0: i32, %arg1: i32, %arg2: i32) -> (i32, i32) {
    %c0_i32 = arith.constant 0 : i32
    return %arg2, %arg1 : i32, i32
  }
  func.func @transform_2(%arg0: i32, %arg1: i32, %arg2: i32) -> (i32, i32) {
    %c0_i32 = arith.constant 0 : i32
    %c0_i32_0 = arith.constant 0 : i32
    return %c0_i32, %arg1 : i32, i32
  }
  func.func @transform_3(%arg0: i32, %arg1: i32, %arg2: i32) -> (i32, i32) {
    %c0_i32 = arith.constant 0 : i32
    return %arg0, %arg1 : i32, i32
  }
}

</mosaic_0001>

<llo_original>
// kernel: tpu_custom_call.1
$region0: #{tpu_custom_call.1}
  #allocation0 [shape = 'u32[]', space=smem, size = 0x4, offset = 0x4, fixed_abs, tag = 'smem constant byte address 0x4 - core index']
  #allocation1 [shape = 'u32[144,128]{1,0:T(1,128)}', space=vmem, size = 0x12000, scoped, tag = 'internal scratch']
  %s0 = inlined_call_operand.hbm [shape: f32[16,128], index: 0, kind: input, shape index: {}]
  %s1 = inlined_call_operand.hbm [shape: f32[128,256], index: 1, kind: input, shape index: {}]
  %s2 = inlined_call_operand.vmem [shape: f32[1,256], index: 2, kind: input, shape index: {}]
  %s3 = inlined_call_operand.hbm [shape: f32[16,256], index: 3, kind: output, shape index: {}]
  %s4 = sld [smem:[#allocation0]]
  $region53: #{tpu_custom_call.1} parent=0
    _
  %s6 = ssub.s32 1, %s4
  %s7 = scalar_select 0, %s6, %s4
  $region1: #{tpu_custom_call.1} parent=0
    #allocation2 [shape = 'u8[8192]{0}', space=vmem, size = 0x2000, scoped, tag = 'input window, operand 0, single buffered']
    #allocation3 [shape = 's32[2]{0}', space=sflag, size = 0x8, scoped, tag = 'scoped memory for tpu_custom_call.1']
    #allocation4 [shape = 's32[2]{0}', space=sflag, size = 0x8, scoped, tag = 'scoped memory for tpu_custom_call.1']
    #allocation5 [shape = 'u8[131072]{0}', space=vmem, size = 0x20000, scoped, tag = 'input window, operand 1']
    #allocation6 [shape = 's32[2]{0}', space=sflag, size = 0x8, scoped, tag = 'scoped memory for tpu_custom_call.1']
    #allocation7 [shape = 'u8[16384]{0}', space=vmem, size = 0x4000, scoped, tag = 'output window, operand 0']
    %8 = vsyncpa [#allocation3], 0
    %9 = vsyncpa [#allocation6], 0
    %s10 = scalar_lea.sflag [#allocation6], 1
    %11 = vsyncpa %s10, 0
    %12 = vsyncpa [#allocation4], 0
    %s13 = scalar_lea.sflag [#allocation4], 1
    %14 = vsyncpa %s13, 0
    loop: start=0, step=1, limit=4
    $region2: #{tpu_custom_call.1} parent=1 // loop_pre_header
      _
    $region3: #{tpu_custom_call.1} parent=1 // loop_header
      %s16 = sphi 0, %s20
      %p17 = scmp.ge.s32.totalorder %s16, 4
      %s23 = sphi 0, %s42
      %s24 = sphi 0, %s38
      %s25 = sphi 0, %s34
      %s26 = sphi 0, %s23
      %s27 = sphi 0, %s24
      %s28 = sphi 0, %s25
      %s29 = sphi 0, %s26
      %s30 = sphi 0, %s27
      %s31 = sphi 0, %s28
      %s47 = sphi 0, %s49
      %s50 = sphi 0, %s47
      %s51 = sphi 0, %s50
      %s67 = sphi 0, %s51
      %s75 = sphi 0, %s77
      %s78 = sphi 0, %s75
      %s79 = sphi 0, %s78
      %s95 = sphi 0, %s79
      %s101 = sphi 0, %s103
      %s104 = sphi 0, %s101
      %s105 = sphi 0, %s104
      %s121 = sphi 0, %s105
      %s129 = sphi 0, %s131
      %s132 = sphi 0, %s129
      %s133 = sphi 0, %s132
      %s149 = sphi 0, %s133
    $region4: #{tpu_custom_call.1} parent=1 // loop_header_branch
      %19 = sbr.rel (%p17) target = $region8
    $region5: #{tpu_custom_call.1} parent=1 // loop_body
      %s21 = ssub.s32 %s16, 1
      %s22 = ssub.s32 %s16, 2
      %s32 = sadd.s32 1, %s25
      %p33 = scmp.ge.s32.totalorder %s32, 1
      %s34 = scalar_select %p33, 0, %s32
      %s35 = sadd.s32 1, %s24
      %s36 = scalar_select %p33, %s35, %s24
      %p37 = scmp.ge.s32.totalorder %s36, 2
      %s38 = scalar_select %p37, 0, %s36
      %s39 = sadd.s32 1, %s23
      %s40 = scalar_select %p37, %s39, %s23
      %p41 = scmp.ge.s32.totalorder %s40, 1
      %s42 = scalar_select %p41, 0, %s40
      %s43 = ssub.s32 %s23, %s42
      %s44 = ssub.s32 %s25, %s34
      %s45 = sor.u32 %s43, %s44
      %p46 = scmp.eq.s32.totalorder %s45, 0
      %s48 = sadd.s32 %s47, 1
      %s49 = scalar_select %p46, %s47, %s48
      %p52 = pneg %p46
      %p53 = scmp.eq.s32.totalorder %s16, 1
      %p54 = por %p52, %p53
      %p55 = scmp.ne.s32.totalorder %s47, %s50
      %p56 = scmp.eq.s32.totalorder %s16, 0
      %p57 = por %p55, %p56
      %p58 = scmp.ne.s32.totalorder %s47, %s50
      %p59 = scmp.eq.s32.totalorder %s21, 1
      %p60 = por %p58, %p59
      %p61 = scmp.ne.s32.totalorder %s50, %s51
      %p62 = scmp.eq.s32.totalorder %s21, 0
      %p63 = por %p61, %p62
      %p64 = scmp.ne.s32.totalorder %s50, %s51
      %p65 = scmp.eq.s32.totalorder %s22, 1
      %p66 = por %p64, %p65
      %p68 = scmp.ne.s32.totalorder %s51, %s67
      %p69 = scmp.eq.s32.totalorder %s22, 0
      %p70 = por %p68, %p69
      %s71 = ssub.s32 %s25, %s34
      %s72 = ssub.s32 %s24, %s38
      %s73 = sor.u32 %s71, %s72
      %p74 = scmp.eq.s32.totalorder %s73, 0
      %s76 = sadd.s32 %s75, 1
      %s77 = scalar_select %p74, %s75, %s76
      %p80 = pneg %p74
      %p81 = scmp.eq.s32.totalorder %s16, 1
      %p82 = por %p80, %p81
      %p83 = scmp.ne.s32.totalorder %s75, %s78
      %p84 = scmp.eq.s32.totalorder %s16, 0
      %p85 = por %p83, %p84
      %p86 = scmp.ne.s32.totalorder %s75, %s78
      %p87 = scmp.eq.s32.totalorder %s21, 1
      %p88 = por %p86, %p87
      %p89 = scmp.ne.s32.totalorder %s78, %s79
      %p90 = scmp.eq.s32.totalorder %s21, 0
      %p91 = por %p89, %p90
      %p92 = scmp.ne.s32.totalorder %s78, %s79
      %p93 = scmp.eq.s32.totalorder %s22, 1
      %p94 = por %p92, %p93
      %p96 = scmp.ne.s32.totalorder %s79, %s95
      %p97 = scmp.eq.s32.totalorder %s22, 0
      %p98 = por %p96, %p97
      %s99 = ssub.s32 %s24, %s38
      %p100 = scmp.eq.s32.totalorder %s99, 0
      %s102 = sadd.s32 %s101, 1
      %s103 = scalar_select %p100, %s101, %s102
      %p106 = pneg %p100
      %p107 = scmp.eq.s32.totalorder %s16, 1
      %p108 = por %p106, %p107
      %p109 = scmp.ne.s32.totalorder %s101, %s104
      %p110 = scmp.eq.s32.totalorder %s16, 0
      %p111 = por %p109, %p110
      %p112 = scmp.ne.s32.totalorder %s101, %s104
      %p113 = scmp.eq.s32.totalorder %s21, 1
      %p114 = por %p112, %p113
      %p115 = scmp.ne.s32.totalorder %s104, %s105
      %p116 = scmp.eq.s32.totalorder %s21, 0
      %p117 = por %p115, %p116
      %p118 = scmp.ne.s32.totalorder %s104, %s105
      %p119 = scmp.eq.s32.totalorder %s22, 1
      %p120 = por %p118, %p119
      %p122 = scmp.ne.s32.totalorder %s105, %s121
      %p123 = scmp.eq.s32.totalorder %s22, 0
      %p124 = por %p122, %p123
      %s125 = ssub.s32 %s23, %s42
      %s126 = ssub.s32 %s24, %s38
      %s127 = sor.u32 %s125, %s126
      %p128 = scmp.eq.s32.totalorder %s127, 0
      %s130 = sadd.s32 %s129, 1
      %s131 = scalar_select %p128, %s129, %s130
      %p134 = pneg %p128
      %p135 = scmp.eq.s32.totalorder %s16, 1
      %p136 = por %p134, %p135
      %p137 = scmp.ne.s32.totalorder %s129, %s132
      %p138 = scmp.eq.s32.totalorder %s16, 0
      %p139 = por %p137, %p138
      %p140 = scmp.ne.s32.totalorder %s129, %s132
      %p141 = scmp.eq.s32.totalorder %s21, 1
      %p142 = por %p140, %p141
      %p143 = scmp.ne.s32.totalorder %s132, %s133
      %p144 = scmp.eq.s32.totalorder %s21, 0
      %p145 = por %p143, %p144
      %p146 = scmp.ne.s32.totalorder %s132, %s133
      %p147 = scmp.eq.s32.totalorder %s22, 1
      %p148 = por %p146, %p147
      %p150 = scmp.ne.s32.totalorder %s133, %s149
      %p151 = scmp.eq.s32.totalorder %s22, 0
      %p152 = por %p150, %p151
      %p153 = scmp.le.s32.totalorder 1, %s16
      %p154 = scmp.lt.s32.totalorder %s16, 3
      %p155 = pnand %p153, %p154
      %p156 = pneg %p155
      // Predicated region
      $region9: #{tpu_custom_call.1} parent=5 // pred_check
        _
      $region10: #{tpu_custom_call.1} parent=5 // pred_check_branch
        %158 = sbr.rel (%p155) target = $region12
      $region11: #{tpu_custom_call.1} parent=5 // pred_region
        %s159 = ssub.s32 %s16, 1
        // Predicated region
        $region13: #{tpu_custom_call.1} parent=11 // pred_check
          %p160 = pneg %p63
        $region14: #{tpu_custom_call.1} parent=11 // pred_check_branch
          %162 = sbr.rel (%p160) target = $region16
        $region15: #{tpu_custom_call.1} parent=11 // pred_region
          %s163 = smul.u32 2, %s26
          %s165 = ssub.s32 256, 256
          %166 = vsyncadd [#allocation3], %s165
          %s167 = sadd.s32 %s28, %s163
          %s168 = smul.addr %s167, 128
          %s169 = scalar_lea.hbm %s0, %s168
          %s170 = sshll.u32 [#allocation2], 4
          %s171 = int_to_ptr.vmem [resolvable:$true] %s170
          %176 = dma.hbm_to_vmem [thread:$0]  %s169, 256, %s171, [#allocation3], 128, 128, 8
        $region16: #{tpu_custom_call.1} parent=11 // pred_fallthru
          _
      $region12: #{tpu_custom_call.1} parent=5 // pred_fallthru
        _
      %p177 = scmp.lt.s32.totalorder %s16, 2
      // Predicated region
      $region17: #{tpu_custom_call.1} parent=5 // pred_check
        %p178 = pneg %p177
      $region18: #{tpu_custom_call.1} parent=5 // pred_check_branch
        %180 = sbr.rel (%p178) target = $region20
      $region19: #{tpu_custom_call.1} parent=5 // pred_region
        // Predicated region
        $region21: #{tpu_custom_call.1} parent=19 // pred_check
          %p181 = pneg %p85
        $region22: #{tpu_custom_call.1} parent=19 // pred_check_branch
          %183 = sbr.rel (%p181) target = $region24
        $region23: #{tpu_custom_call.1} parent=19 // pred_region
          %s184 = sand.u32 %s75, 1
          %s185 = scalar_lea.sflag [#allocation6], %s184
          %s186 = sand.u32 %s75, 1
          %s187 = smul.addr %s186, 128
          %s188 = scalar_lea.vmem [#allocation5], %s187
          %s189 = smul.u32 16, %s25
          %s191 = ssub.s32 2048, 2048
          %192 = vsyncadd %s185, %s191
          %s193 = smul.addr %s189, 2
          %s194 = sadd.s32 %s24, %s193
          %s195 = smul.addr %s194, 128
          %s196 = scalar_lea.hbm %s1, %s195
          %s197 = sshll.u32 %s188, 4
          %s198 = int_to_ptr.vmem [resolvable:$true] %s197
          %203 = dma.hbm_to_vmem [thread:$0]  %s196, 2048, %s198, %s185, 256, 128, 8
        $region24: #{tpu_custom_call.1} parent=19 // pred_fallthru
          _
        // Predicated region
        $region25: #{tpu_custom_call.1} parent=19 // pred_check
          %p204 = pneg %p111
        $region26: #{tpu_custom_call.1} parent=19 // pred_check_branch
          %206 = sbr.rel (%p204) target = $region28
        $region27: #{tpu_custom_call.1} parent=19 // pred_region
          %p207 = scmp.lt.s32.totalorder %s24, 1
          %s208 = scalar_select %p207, %s24, 1
          %s209 = scalar_lea.vmem %s2, %s208
        $region28: #{tpu_custom_call.1} parent=19 // pred_fallthru
          _
      $region20: #{tpu_custom_call.1} parent=5 // pred_fallthru
        _
      %p210 = scmp.le.s32.totalorder 1, %s16
      %p211 = scmp.lt.s32.totalorder %s16, 3
      %p212 = pnand %p210, %p211
      %p213 = pneg %p212
      // Predicated region
      $region29: #{tpu_custom_call.1} parent=5 // pred_check
        _
      $region30: #{tpu_custom_call.1} parent=5 // pred_check_branch
        %215 = sbr.rel (%p212) target = $region32
      $region31: #{tpu_custom_call.1} parent=5 // pred_region
        %s216 = ssub.s32 %s16, 1
        // Predicated region
        $region33: #{tpu_custom_call.1} parent=31 // pred_check
          %p217 = pneg %p63
        $region34: #{tpu_custom_call.1} parent=31 // pred_check_branch
          %219 = sbr.rel (%p217) target = $region36
        $region35: #{tpu_custom_call.1} parent=31 // pred_region
          %220 = dma.done [#allocation3], 256
        $region36: #{tpu_custom_call.1} parent=31 // pred_fallthru
          _
        %s221 = sand.u32 %s78, 1
        %s222 = scalar_lea.sflag [#allocation6], %s221
        %s223 = sand.u32 %s78, 1
        %s224 = smul.addr %s223, 128
        %s225 = scalar_lea.vmem [#allocation5], %s224
        // Predicated region
        $region37: #{tpu_custom_call.1} parent=31 // pred_check
          %p226 = pneg %p91
        $region38: #{tpu_custom_call.1} parent=31 // pred_check_branch
          %228 = sbr.rel (%p226) target = $region40
        $region39: #{tpu_custom_call.1} parent=31 // pred_region
          %229 = dma.done %s222, 2048
        $region40: #{tpu_custom_call.1} parent=31 // pred_fallthru
          _
        %p230 = pneg %p63
        %p231 = pneg %p60
        %s232 = sand.u32 %s78, 1
        %s233 = scalar_lea.sflag [#allocation6], %s232
        %s234 = sand.u32 %s78, 1
        %s235 = smul.addr %s234, 128
        %s236 = scalar_lea.vmem [#allocation5], %s235
        %p237 = pneg %p91
        %p238 = pneg %p88
        %p239 = scmp.lt.s32.totalorder %s27, 1
        %s240 = scalar_select %p239, %s27, 1
        %s241 = scalar_lea.vmem %s2, %s240
        %p242 = pneg %p117
        %p243 = pneg %p114
        %p244 = pneg %p145
        %p245 = pneg %p142
        %s246 = sand.u32 %s132, 1
        %s247 = scalar_lea.sflag [#allocation4], %s246
        %s248 = sand.u32 %s132, 1
        %s249 = smul.addr %s248, 16
        %s250 = scalar_lea.vmem [#allocation7], %s249
        %s251 = smul.u32 2, %s26
        %s252 = smul.u32 16, %s28
        %p253 = scmp.lt.s32.totalorder %s27, 1
        %s254 = scalar_select %p253, %s27, 1
        %s255 = scalar_lea.vmem %s2, %s254
        %s256 = smul.u32 2, %s26
        %v257 = vld [vmem:[#allocation2] sm:$0xff]
        %v258 = vld [vmem:[#allocation2 + $0x8] sm:$0xff]
        %v259 = vld [vmem:[%s225] sm:$0xff]
        %v260 = vld [vmem:[%s225 + $0x8] sm:$0xff]
        %v261 = vld [vmem:[%s225 + $0x10] sm:$0xff]
        %v262 = vld [vmem:[%s225 + $0x18] sm:$0xff]
        %v263 = vld [vmem:[%s225 + $0x20] sm:$0xff]
        %v264 = vld [vmem:[%s225 + $0x28] sm:$0xff]
        %v265 = vld [vmem:[%s225 + $0x30] sm:$0xff]
        %v266 = vld [vmem:[%s225 + $0x38] sm:$0xff]
        %v267 = vld [vmem:[%s225 + $0x40] sm:$0xff]
        %v268 = vld [vmem:[%s225 + $0x48] sm:$0xff]
        %v269 = vld [vmem:[%s225 + $0x50] sm:$0xff]
        %v270 = vld [vmem:[%s225 + $0x58] sm:$0xff]
        %v271 = vld [vmem:[%s225 + $0x60] sm:$0xff]
        %v272 = vld [vmem:[%s225 + $0x68] sm:$0xff]
        %v273 = vld [vmem:[%s225 + $0x70] sm:$0xff]
        %v274 = vld [vmem:[%s225 + $0x78] sm:$0xff]
        %v275 = vld [vmem:[%s255] sm:$0x1]
        %v277 = vlaneseq
        %v278 = vshrl.u32 %v277, 7
        %v279 = vsub.s32 0, %v278
        %v280 = vrot.slane %v275, %v279
        %282 = vmatprep.subr.mxu0 0.0
        %283 = vmatpush1.msra.mxu0 %v259
        %284 = vmatprep.subr.mxu0 0.0
        %285 = vmatpush1.msra.mxu0 %v260
        %286 = vmatprep.subr.mxu0 0.0
        %287 = vmatpush1.msra.mxu0 %v261
        %288 = vmatprep.subr.mxu0 0.0
        %289 = vmatpush1.msra.mxu0 %v262
        %290 = vmatprep.subr.mxu0 0.0
        %291 = vmatpush1.msra.mxu0 %v263
        %292 = vmatprep.subr.mxu0 0.0
        %293 = vmatpush1.msra.mxu0 %v264
        %294 = vmatprep.subr.mxu0 0.0
        %295 = vmatpush1.msra.mxu0 %v265
        %296 = vmatprep.subr.mxu0 0.0
        %297 = vmatpush1.msra.mxu0 %v266
        %298 = vmatprep.subr.mxu0 0.0
        %299 = vmatpush1.msra.mxu0 %v267
        %300 = vmatprep.subr.mxu0 0.0
        %301 = vmatpush1.msra.mxu0 %v268
        %302 = vmatprep.subr.mxu0 0.0
        %303 = vmatpush1.msra.mxu0 %v269
        %304 = vmatprep.subr.mxu0 0.0
        %305 = vmatpush1.msra.mxu0 %v270
        %306 = vmatprep.subr.mxu0 0.0
        %307 = vmatpush1.msra.mxu0 %v271
        %308 = vmatprep.subr.mxu0 0.0
        %309 = vmatpush1.msra.mxu0 %v272
        %310 = vmatprep.subr.mxu0 0.0
        %311 = vmatpush1.msra.mxu0 %v273
        %312 = vmatprep.subr.mxu0 0.0
        %313 = vmatpush1.msra.mxu0 %v274
        %314 = vmatprep.subr.mxu0 0.0
        %315 = vmatpush1.msra.mxu0 0.0
        %316 = vmatprep.subr.mxu0 0.0
        %317 = vmatpush1.msra.mxu0 0.0
        %318 = vmatprep.subr.mxu0 0.0
        %319 = vmatpush1.msra.mxu0 0.0
        %320 = vmatprep.subr.mxu0 0.0
        %321 = vmatpush1.msra.mxu0 0.0
        %322 = vmatprep.subr.mxu0 0.0
        %323 = vmatpush1.msra.mxu0 0.0
        %324 = vmatprep.subr.mxu0 0.0
        %325 = vmatpush1.msra.mxu0 0.0
        %326 = vmatprep.subr.mxu0 0.0
        %327 = vmatpush1.msra.mxu0 0.0
        %328 = vmatprep.subr.mxu0 0.0
        %329 = vmatpush1.msra.mxu0 0.0
        %330 = vmatprep.subr.mxu0 0.0
        %331 = vmatpush1.msra.mxu0 0.0
        %332 = vmatprep.subr.mxu0 0.0
        %333 = vmatpush1.msra.mxu0 0.0
        %334 = vmatprep.subr.mxu0 0.0
        %335 = vmatpush1.msra.mxu0 0.0
        %336 = vmatprep.subr.mxu0 0.0
        %337 = vmatpush1.msra.mxu0 0.0
        %338 = vmatprep.subr.mxu0 0.0
        %339 = vmatpush1.msra.mxu0 0.0
        %340 = vmatprep.subr.mxu0 0.0
        %341 = vmatpush1.msra.mxu0 0.0
        %342 = vmatprep.subr.mxu0 0.0
        %343 = vmatpush1.msra.mxu0 0.0
        %344 = vmatprep.subr.mxu0 0.0
        %345 = vmatpush1.msra.mxu0 0.0
        %346 = vmatprep.mubr.f32.mxu0 0.0
        %347 = vmatmul.mubr.f32.gmra.mrb[0].mxu0 %v257
        %v348 = vpop.f32.mrb[0].mxu0
        %v349 = vadd.f32 %v280, %v348
        %v350 = vpop.f32.mrb[0].mxu0
        %351 = vmatprep.mubr.f32.mxu0 0.0
        %352 = vmatmul.mubr.f32.gmra.mrb[0].mxu0 %v258
        %v353 = vpop.f32.mrb[0].mxu0
        %v354 = vadd.f32 %v280, %v353
        %v355 = vpop.f32.mrb[0].mxu0
        %356 = vdwg.mxu0
        %357 = vst [vmem:[%s250] sm:$0xff] %v349
        %358 = vst [vmem:[%s250 + $0x8] sm:$0xff] %v354
        %s359 = sand.u32 %s132, 1
        %s360 = scalar_lea.sflag [#allocation4], %s359
        %s361 = sand.u32 %s132, 1
        %s362 = smul.addr %s361, 16
        %s363 = scalar_lea.vmem [#allocation7], %s362
        // Predicated region
        $region41: #{tpu_custom_call.1} parent=31 // pred_check
          %p364 = pneg %p142
        $region42: #{tpu_custom_call.1} parent=31 // pred_check_branch
          %366 = sbr.rel (%p364) target = $region44
        $region43: #{tpu_custom_call.1} parent=31 // pred_region
          %s367 = smul.u32 2, %s26
          %s369 = ssub.s32 256, 256
          %370 = vsyncadd %s360, %s369
          %s371 = smul.addr %s367, 2
          %s372 = sadd.s32 %s27, %s371
          %s373 = smul.addr %s372, 128
          %s374 = scalar_lea.hbm %s3, %s373
          %s375 = sshll.u32 %s363, 4
          %s376 = int_to_ptr.vmem [resolvable:$true] %s375
          %381 = dma.vmem_to_hbm [thread:$0]  %s376, 256, %s374, %s360, 128, 256, 8
        $region44: #{tpu_custom_call.1} parent=31 // pred_fallthru
          _
      $region32: #{tpu_custom_call.1} parent=5 // pred_fallthru
        _
      %p382 = scmp.le.s32.totalorder 2, %s16
      // Predicated region
      $region45: #{tpu_custom_call.1} parent=5 // pred_check
        %p383 = pneg %p382
      $region46: #{tpu_custom_call.1} parent=5 // pred_check_branch
        %385 = sbr.rel (%p383) target = $region48
      $region47: #{tpu_custom_call.1} parent=5 // pred_region
        %s386 = ssub.s32 %s16, 2
        // Predicated region
        $region49: #{tpu_custom_call.1} parent=47 // pred_check
          %p387 = pneg %p148
        $region50: #{tpu_custom_call.1} parent=47 // pred_check_branch
          %389 = sbr.rel (%p387) target = $region52
        $region51: #{tpu_custom_call.1} parent=47 // pred_region
          %s390 = sand.u32 %s133, 1
          %s391 = scalar_lea.sflag [#allocation4], %s390
          %s392 = sand.u32 %s133, 1
          %s393 = smul.addr %s392, 16
          %s394 = scalar_lea.vmem [#allocation7], %s393
          %395 = dma.done %s391, 256
        $region52: #{tpu_custom_call.1} parent=47 // pred_fallthru
          _
      $region48: #{tpu_custom_call.1} parent=5 // pred_fallthru
        _
    $region6: #{tpu_custom_call.1} parent=1 // loop_footer
      %s20 = sadd.s32 1, %s16
    $region7: #{tpu_custom_call.1} parent=1 // loop_footer_branch
      %15 = sbr.rel target = $region3
    $region8: #{tpu_custom_call.1} parent=1 // loop_exit
      _
    %396 = vsyncpa [#allocation3], 1
    %s397 = scalar_lea.sflag [#allocation3], 1
    %398 = vsyncpa %s397, 1
    %399 = vsyncpa [#allocation6], 1
    %s400 = scalar_lea.sflag [#allocation6], 1
    %401 = vsyncpa %s400, 1
    %402 = vsyncpa [#allocation4], 1
    %s403 = scalar_lea.sflag [#allocation4], 1
    %404 = vsyncpa %s403, 1

</llo_original>
